<compile_context>
chip_gen: v5e
topology: v5e:2x2
jax: 0.10.0
libtpu: 0.0.40
codegen_flags: <defaults>
</compile_context>

<pallas_src>
import jax
import jax.numpy as jnp
from jax.experimental import pallas as pl
from jax.experimental.pallas import tpu as pltpu


def _round_up(x, m):
    return (x + m - 1) // m * m


def cnn2_kernel(x_ref,        # [TB, L, E]    bf16  embedded tokens (batch tile)
                w_ref,        # [4*E, Npad]   bf16  fused conv weight (taps stacked along K)
                mb_ref,       # [Tp, Npad]    f32   bias + row-validity mask (additive)
                wfc_ref,      # [Npad, C]     bf16  lane-packed FC weight (zero pad rows)
                bfc_ref,      # [1, C]        f32
                out_ref,      # [TB, C]       f32   logits
                a_ref):       # VMEM scratch [TB, Tp, 4*E] bf16 (im2col LHS)
    TB, L, E = x_ref.shape
    _, Tp, _ = a_ref.shape
    Npad = mb_ref.shape[-1]

    x = x_ref[...]                                               # [TB, L, E] bf16
    # Build the im2col LHS: tap j occupies lanes [j*E, (j+1)*E) and rows [3-j, 3-j+L).
    # The small out-of-range row bands must stay zero; re-zero them every step (cheap)
    # because the scratch persists across grid steps and is per-TensorCore, so a one-time
    # @pl.when(program_id==0) init would be incorrect under "parallel" core sharding.
    for j in range(4):
        lo = 3 - j
        if lo > 0:
            a_ref[:, 0:lo, j * E:(j + 1) * E] = jnp.zeros((TB, lo, E), x.dtype)
        if lo + L < Tp:
            a_ref[:, lo + L:Tp, j * E:(j + 1) * E] = jnp.zeros((TB, Tp - lo - L, E), x.dtype)
        a_ref[:, lo:lo + L, j * E:(j + 1) * E] = x

    # ONE fused MXU matmul for all three conv branches: M = TB*Tp, K = 4*E, N = Npad.
    z = jnp.dot(a_ref[...].reshape(TB * Tp, 4 * E), w_ref[...],
                preferred_element_type=jnp.float32)              # [TB*Tp, Npad] f32

    # Fused bias add + row-validity mask (invalid rows get -1e30 -> ReLU -> 0), ReLU,
    # and the global max-pool over time.  All in f32.
    h = jnp.maximum(z.reshape(TB, Tp, Npad) + mb_ref[...][None], 0.0)
    pooled = jnp.max(h, axis=1)                                  # [TB, Npad] f32

    # fc(cat([p2, p3, p4])) as one matmul: pooled lanes are already in concat order and
    # the FC weight's padding rows are zero.
    out_ref[...] = (jnp.dot(pooled.astype(jnp.bfloat16), wfc_ref[...],
                            preferred_element_type=jnp.float32) + bfc_ref[...])


def cnn2_forward(tokens, emb, params):
    """tokens: [B, L] int32; emb: [V, E] (ideally pre-cast bf16). Returns logits [B, C] f32."""
    (w2, b2, w3, b3, w4, b4, wfc, bfc) = params
    B, L = tokens.shape
    E = emb.shape[1]
    F = w2.shape[-1]
    C = wfc.shape[-1]

    K4 = 4 * E                       # im2col contraction depth (k_max = 4 taps)
    Npad = _round_up(3 * F, 128)     # all three branches share one lane-dense N block
    T = L + 3                        # fused conv-output rows (common time pad of 3)
    Tp = _round_up(T, 8)             # sublane-aligned row count

    # ---- fused conv weight [4E, Npad]: branch k uses taps 0..k-1, lanes [(k-2)F:(k-1)F) ----
    W = jnp.zeros((K4, Npad), jnp.float32)
    W = W.at[:2 * E, 0:F].set(w2.reshape(2 * E, F))
    W = W.at[:3 * E, F:2 * F].set(w3.reshape(3 * E, F))
    W = W.at[:4 * E, 2 * F:3 * F].set(w4.reshape(4 * E, F))
    W = W.astype(jnp.bfloat16)

    # ---- bias + row-validity mask, fused into one additive [Tp, Npad] f32 term ----
    # Branch k's conv output of length L+k-1 lives at rows [4-k, L+3); rows outside that
    # range (and the Tp alignment padding) get -1e30 so ReLU maps them to 0 < valid max.
    bias_row = jnp.zeros((Npad,), jnp.float32)
    bias_row = bias_row.at[0:F].set(b2).at[F:2 * F].set(b3).at[2 * F:3 * F].set(b4)
    rows = jnp.arange(Tp)[:, None]
    lanes = jnp.arange(Npad)[None, :]
    first_valid = jnp.where(lanes < F, 2, jnp.where(lanes < 2 * F, 1, 0))
    valid = (rows >= first_valid) & (rows < T)
    mb = jnp.where(valid, bias_row[None, :], -1e30).astype(jnp.float32)

    # ---- FC weight packed to the pooled-feature lane layout (padding rows are zero) ----
    wfc_p = jnp.zeros((Npad, C), jnp.float32).at[:3 * F, :].set(wfc).astype(jnp.bfloat16)
    bfc_p = bfc.reshape(1, C).astype(jnp.float32)

    # ---- batch-tile sizing from total live VMEM (per-chip capacity aware) ----
    try:
        info = pltpu.get_tpu_info()
        vmem_cap = int(getattr(info, "vmem_capacity_bytes", 64 * 1024 * 1024))
    except Exception:
        vmem_cap = 64 * 1024 * 1024                      # assume v7x (most restrictive)
    vmem_limit = min(3 * vmem_cap // 4, 64 * 1024 * 1024)  # ~48 MiB on v7x, 64 MiB v5e/v6e

    per_row = (Tp * K4 * 2                 # im2col scratch (bf16)
               + 2 * Tp * Npad * 4         # z + masked/ReLU'd slab (f32)
               + 2 * 2 * L * E * 2)        # double-buffered bf16 x tile
    fixed = 2 * (K4 * Npad * 2 + Tp * Npad * 4 + Npad * C * 2 + C * 4) + (2 << 20)
    budget = max(vmem_limit - fixed, 1 << 20)
    TB = max(8, min(512, (budget // per_row) // 8 * 8))
    TB = min(TB, _round_up(B, 8))
    # Prefer >= 2 grid steps so a 2-TensorCore chip (v7x) shards the batch across cores.
    while TB > 8 and _round_up(B, TB) // TB < 2:
        TB = max(8, (TB // 2) // 8 * 8)
    Bp = _round_up(B, TB)

    # ---- activations: pad the (tiny) token array, then gather the bf16 table ----
    # TODO(synk): the embedding row-gather stays in XLA (data-dependent gather); a DMA
    # gather kernel is possible but not worth it at these sizes.
    emb_bf16 = emb if emb.dtype == jnp.bfloat16 else emb.astype(jnp.bfloat16)
    tok = jnp.pad(tokens, ((0, Bp - B), (0, 0))) if Bp > B else tokens
    x_emb = jnp.take(emb_bf16, tok, axis=0)                       # [Bp, L, E] bf16

    const2 = lambda i: (0, 0)
    out = pl.pallas_call(
        cnn2_kernel,
        out_shape=jax.ShapeDtypeStruct((Bp, C), jnp.float32),
        grid=(Bp // TB,),
        in_specs=[
            pl.BlockSpec((TB, L, E), lambda i: (i, 0, 0)),
            pl.BlockSpec((K4, Npad), const2),
            pl.BlockSpec((Tp, Npad), const2),
            pl.BlockSpec((Npad, C), const2),
            pl.BlockSpec((1, C), const2),
        ],
        out_specs=pl.BlockSpec((TB, C), lambda i: (i, 0)),
        scratch_shapes=[pltpu.VMEM((TB, Tp, K4), jnp.bfloat16)],
        compiler_params=pltpu.CompilerParams(
            dimension_semantics=("parallel",),        # shard batch grid across cores
            vmem_limit_bytes=int(vmem_limit)),
    )(x_emb, W, mb, wfc_p, bfc_p)

    return out[:B]


def cnn2_reference(tokens, emb, params):
    """Pure-JAX f32 reference of CNN_2.forward (eval mode)."""
    (w2, b2, w3, b3, w4, b4, wfc, bfc) = params
    x = jnp.take(emb, tokens, axis=0)                   # [B, L, E] f32
    B, L, E = x.shape

    def branch(w, b, k):
        pad = k - 1
        xp = jnp.pad(x, ((0, 0), (pad, pad), (0, 0)))
        out_len = L + k - 1
        acc = jnp.zeros((B, out_len, w.shape[-1]), jnp.float32) + b
        for j in range(k):
            acc = acc + jnp.einsum('ble,ef->blf', xp[:, j:j + out_len, :], w[j],
                                   preferred_element_type=jnp.float32)
        return jnp.max(jnp.maximum(acc, 0.0), axis=1)

    pooled = jnp.concatenate([branch(w2, b2, 2), branch(w3, b3, 3), branch(w4, b4, 4)], axis=1)
    return pooled @ wfc + bfc


def init_params(key, vocab_size, embed_size, num_filters, num_class):
    ks = jax.random.split(key, 10)
    # Embedding: xavier_normal_ -> std = sqrt(2 / (V + E))
    emb = jax.random.normal(ks[0], (vocab_size, embed_size), jnp.float32) * jnp.sqrt(
        2.0 / (vocab_size + embed_size))

    def conv_wb(kw, kb, k):
        fan_in = k * embed_size
        w = jax.random.normal(kw, (k, embed_size, num_filters), jnp.float32) / jnp.sqrt(fan_in)
        b = jax.random.normal(kb, (num_filters,), jnp.float32) * 0.01
        return w, b

    w2, b2 = conv_wb(ks[1], ks[2], 2)
    w3, b3 = conv_wb(ks[3], ks[4], 3)
    w4, b4 = conv_wb(ks[5], ks[6], 4)
    wfc = jax.random.normal(ks[7], (3 * num_filters, num_class), jnp.float32) / jnp.sqrt(
        3 * num_filters)
    bfc = jax.random.normal(ks[8], (num_class,), jnp.float32) * 0.01
    return emb, (w2, b2, w3, b3, w4, b4, wfc, bfc), ks[9]


if __name__ == "__main__":
    VOCAB, EMBED, FILTERS, CLASSES = 50, 16, 32, 5
    B, L = 2, 8

    emb, params, tok_key = init_params(jax.random.PRNGKey(0), VOCAB, EMBED, FILTERS, CLASSES)
    tokens = jax.random.randint(tok_key, (B, L), 0, VOCAB, dtype=jnp.int32)

    emb_bf16 = emb.astype(jnp.bfloat16)   # cast the table ONCE, outside the forward path

    out = jax.jit(cnn2_forward)(tokens, emb_bf16, params)
    out = jax.block_until_ready(out)

    assert out.shape == (B, CLASSES)
    assert bool(jnp.all(jnp.isfinite(out)))

    ref = cnn2_reference(tokens, emb, params)
    assert bool(jnp.allclose(out, ref, atol=5e-2, rtol=5e-2))
    print("KERNEL_OK")
</pallas_src>

<mosaic_0001>
module attributes {stable_mosaic.version = 11 : i64} {
  func.func @cnn2_kernel(%arg0: i32, %arg1: memref<8x8x16xbf16, #tpu.memory_space<vmem>>, %arg2: memref<64x128xbf16, #tpu.memory_space<vmem>>, %arg3: memref<16x128xf32, #tpu.memory_space<vmem>>, %arg4: memref<128x5xbf16, #tpu.memory_space<vmem>>, %arg5: memref<1x5xf32, #tpu.memory_space<vmem>>, %arg6: memref<8x5xf32, #tpu.memory_space<vmem>>, %arg7: memref<8x16x64xbf16, #tpu.memory_space<vmem>>) attributes {dimension_semantics = [#tpu.dimension_semantics<parallel>], iteration_bounds = array<i64: 1>, scalar_prefetch = 0 : i64, scratch_operands = 1 : i64, tpu.core_type = #tpu.core_type<tc>, window_params = [{transform_indices = @transform_0, window_bounds = array<i64: 8, 8, 16>}, {pipeline_mode = #tpu.pipeline_mode<synchronous>, transform_indices = @transform_1, window_bounds = array<i64: 64, 128>}, {pipeline_mode = #tpu.pipeline_mode<synchronous>, transform_indices = @transform_2, window_bounds = array<i64: 16, 128>}, {pipeline_mode = #tpu.pipeline_mode<synchronous>, transform_indices = @transform_3, window_bounds = array<i64: 128, 5>}, {pipeline_mode = #tpu.pipeline_mode<synchronous>, transform_indices = @transform_4, window_bounds = array<i64: 1, 5>}, {transform_indices = @transform_5, window_bounds = array<i64: 8, 5>}]} {
    %c0 = arith.constant 0 : index
    %c0_0 = arith.constant 0 : index
    %c0_1 = arith.constant 0 : index
    %0 = vector.load %arg1[%c0, %c0_0, %c0_1] : memref<8x8x16xbf16, #tpu.memory_space<vmem>>, vector<8x8x16xbf16>
    %cst = arith.constant 0.000000e+00 : bf16
    %1 = vector.broadcast %cst : bf16 to vector<8x3x16xbf16>
    %c0_2 = arith.constant 0 : index
    %c0_3 = arith.constant 0 : index
    %c0_4 = arith.constant 0 : index
    %2 = vector.load %arg7[%c0_2, %c0_3, %c0_4] : memref<8x16x64xbf16, #tpu.memory_space<vmem>>, vector<8x3x16xbf16>
    tpu.vector_store %arg7[%c0_2, %c0_3, %c0_4], %1 {strides = array<i32>} : memref<8x16x64xbf16, #tpu.memory_space<vmem>>, vector<8x3x16xbf16>,
    %cst_5 = arith.constant 0.000000e+00 : bf16
    %3 = vector.broadcast %cst_5 : bf16 to vector<8x5x16xbf16>
    %c0_6 = arith.constant 0 : index
    %c11 = arith.constant 11 : index
    %c0_7 = arith.constant 0 : index
    %4 = vector.load %arg7[%c0_6, %c11, %c0_7] : memref<8x16x64xbf16, #tpu.memory_space<vmem>>, vector<8x5x16xbf16>
    tpu.vector_store %arg7[%c0_6, %c11, %c0_7], %3 {strides = array<i32>} : memref<8x16x64xbf16, #tpu.memory_space<vmem>>, vector<8x5x16xbf16>,
    %c0_8 = arith.constant 0 : index
    %c3 = arith.constant 3 : index
    %c0_9 = arith.constant 0 : index
    %5 = vector.load %arg7[%c0_8, %c3, %c0_9] : memref<8x16x64xbf16, #tpu.memory_space<vmem>>, vector<8x8x16xbf16>
    tpu.vector_store %arg7[%c0_8, %c3, %c0_9], %0 {strides = array<i32>} : memref<8x16x64xbf16, #tpu.memory_space<vmem>>, vector<8x8x16xbf16>,
    %cst_10 = arith.constant 0.000000e+00 : bf16
    %6 = vector.broadcast %cst_10 : bf16 to vector<8x2x16xbf16>
    %c0_11 = arith.constant 0 : index
    %c0_12 = arith.constant 0 : index
    %c16 = arith.constant 16 : index
    %7 = vector.load %arg7[%c0_11, %c0_12, %c16] : memref<8x16x64xbf16, #tpu.memory_space<vmem>>, vector<8x2x16xbf16>
    tpu.vector_store %arg7[%c0_11, %c0_12, %c16], %6 {strides = array<i32>} : memref<8x16x64xbf16, #tpu.memory_space<vmem>>, vector<8x2x16xbf16>,
    %cst_13 = arith.constant 0.000000e+00 : bf16
    %8 = vector.broadcast %cst_13 : bf16 to vector<8x6x16xbf16>
    %c0_14 = arith.constant 0 : index
    %c10 = arith.constant 10 : index
    %c16_15 = arith.constant 16 : index
    %9 = vector.load %arg7[%c0_14, %c10, %c16_15] : memref<8x16x64xbf16, #tpu.memory_space<vmem>>, vector<8x6x16xbf16>
    tpu.vector_store %arg7[%c0_14, %c10, %c16_15], %8 {strides = array<i32>} : memref<8x16x64xbf16, #tpu.memory_space<vmem>>, vector<8x6x16xbf16>,
    %c0_16 = arith.constant 0 : index
    %c2 = arith.constant 2 : index
    %c16_17 = arith.constant 16 : index
    %10 = vector.load %arg7[%c0_16, %c2, %c16_17] : memref<8x16x64xbf16, #tpu.memory_space<vmem>>, vector<8x8x16xbf16>
    tpu.vector_store %arg7[%c0_16, %c2, %c16_17], %0 {strides = array<i32>} : memref<8x16x64xbf16, #tpu.memory_space<vmem>>, vector<8x8x16xbf16>,
    %cst_18 = arith.constant 0.000000e+00 : bf16
    %11 = vector.broadcast %cst_18 : bf16 to vector<8x1x16xbf16>
    %c0_19 = arith.constant 0 : index
    %c0_20 = arith.constant 0 : index
    %c32 = arith.constant 32 : index
    %12 = vector.load %arg7[%c0_19, %c0_20, %c32] : memref<8x16x64xbf16, #tpu.memory_space<vmem>>, vector<8x1x16xbf16>
    tpu.vector_store %arg7[%c0_19, %c0_20, %c32], %11 {strides = array<i32>} : memref<8x16x64xbf16, #tpu.memory_space<vmem>>, vector<8x1x16xbf16>,
    %cst_21 = arith.constant 0.000000e+00 : bf16
    %13 = vector.broadcast %cst_21 : bf16 to vector<8x7x16xbf16>
    %c0_22 = arith.constant 0 : index
    %c9 = arith.constant 9 : index
    %c32_23 = arith.constant 32 : index
    %14 = vector.load %arg7[%c0_22, %c9, %c32_23] : memref<8x16x64xbf16, #tpu.memory_space<vmem>>, vector<8x7x16xbf16>
    tpu.vector_store %arg7[%c0_22, %c9, %c32_23], %13 {strides = array<i32>} : memref<8x16x64xbf16, #tpu.memory_space<vmem>>, vector<8x7x16xbf16>,
    %c0_24 = arith.constant 0 : index
    %c1 = arith.constant 1 : index
    %c32_25 = arith.constant 32 : index
    %15 = vector.load %arg7[%c0_24, %c1, %c32_25] : memref<8x16x64xbf16, #tpu.memory_space<vmem>>, vector<8x8x16xbf16>
    tpu.vector_store %arg7[%c0_24, %c1, %c32_25], %0 {strides = array<i32>} : memref<8x16x64xbf16, #tpu.memory_space<vmem>>, vector<8x8x16xbf16>,
    %cst_26 = arith.constant 0.000000e+00 : bf16
    %16 = vector.broadcast %cst_26 : bf16 to vector<8x8x16xbf16>
    %c0_27 = arith.constant 0 : index
    %c8 = arith.constant 8 : index
    %c48 = arith.constant 48 : index
    %17 = vector.load %arg7[%c0_27, %c8, %c48] : memref<8x16x64xbf16, #tpu.memory_space<vmem>>, vector<8x8x16xbf16>
    tpu.vector_store %arg7[%c0_27, %c8, %c48], %16 {strides = array<i32>} : memref<8x16x64xbf16, #tpu.memory_space<vmem>>, vector<8x8x16xbf16>,
    %c0_28 = arith.constant 0 : index
    %c0_29 = arith.constant 0 : index
    %c48_30 = arith.constant 48 : index
    %18 = vector.load %arg7[%c0_28, %c0_29, %c48_30] : memref<8x16x64xbf16, #tpu.memory_space<vmem>>, vector<8x8x16xbf16>
    tpu.vector_store %arg7[%c0_28, %c0_29, %c48_30], %0 {strides = array<i32>} : memref<8x16x64xbf16, #tpu.memory_space<vmem>>, vector<8x8x16xbf16>,
    %c0_31 = arith.constant 0 : index
    %c0_32 = arith.constant 0 : index
    %c0_33 = arith.constant 0 : index
    %19 = vector.load %arg7[%c0_31, %c0_32, %c0_33] : memref<8x16x64xbf16, #tpu.memory_space<vmem>>, vector<8x16x64xbf16>
    %20 = vector.shape_cast %19 : vector<8x16x64xbf16> to vector<128x64xbf16>
    %c0_34 = arith.constant 0 : index
    %c0_35 = arith.constant 0 : index
    %21 = vector.load %arg2[%c0_34, %c0_35] : memref<64x128xbf16, #tpu.memory_space<vmem>>, vector<64x128xbf16>
    %cst_36 = arith.constant dense<0.000000e+00> : vector<128x128xf32>
    %22 = tpu.matmul %20, %21, %cst_36 {dimension_numbers = #tpu.dot_dimension_numbers<[1], [0], [0], [1], [0, 0, 1, 1], [], []>} : vector<128x64xbf16>, vector<64x128xbf16>, vector<128x128xf32> -> vector<128x128xf32>
    %23 = vector.shape_cast %22 : vector<128x128xf32> to vector<8x16x128xf32>
    %c0_37 = arith.constant 0 : index
    %c0_38 = arith.constant 0 : index
    %24 = vector.load %arg3[%c0_37, %c0_38] : memref<16x128xf32, #tpu.memory_space<vmem>>, vector<16x128xf32>
    %25 = vector.shape_cast %24 : vector<16x128xf32> to vector<1x16x128xf32>
    %26 = vector.broadcast %25 : vector<1x16x128xf32> to vector<8x16x128xf32>
    %27 = arith.addf %23, %26 : vector<8x16x128xf32>
    %cst_39 = arith.constant 0.000000e+00 : f32
    %28 = vector.broadcast %cst_39 : f32 to vector<8x16x128xf32>
    %29 = arith.maximumf %27, %28 : vector<8x16x128xf32>
    %cst_40 = arith.constant dense<0xFF800000> : vector<8x128xf32>
    %30 = vector.multi_reduction <maximumf>, %29, %cst_40 [1] : vector<8x16x128xf32> to vector<8x128xf32>
    %31 = arith.truncf %30 : vector<8x128xf32> to vector<8x128xbf16>
    %c0_41 = arith.constant 0 : index
    %c0_42 = arith.constant 0 : index
    %32 = vector.load %arg4[%c0_41, %c0_42] : memref<128x5xbf16, #tpu.memory_space<vmem>>, vector<128x5xbf16>
    %cst_43 = arith.constant dense<0.000000e+00> : vector<8x5xf32>
    %33 = tpu.matmul %31, %32, %cst_43 {dimension_numbers = #tpu.dot_dimension_numbers<[1], [0], [0], [1], [0, 0, 1, 1], [], []>} : vector<8x128xbf16>, vector<128x5xbf16>, vector<8x5xf32> -> vector<8x5xf32>
    %c0_44 = arith.constant 0 : index
    %c0_45 = arith.constant 0 : index
    %34 = vector.load %arg5[%c0_44, %c0_45] : memref<1x5xf32, #tpu.memory_space<vmem>>, vector<1x5xf32>
    %35 = vector.broadcast %34 : vector<1x5xf32> to vector<8x5xf32>
    %36 = arith.addf %33, %35 : vector<8x5xf32>
    %c0_46 = arith.constant 0 : index
    %c0_47 = arith.constant 0 : index
    %37 = vector.load %arg6[%c0_46, %c0_47] : memref<8x5xf32, #tpu.memory_space<vmem>>, vector<8x5xf32>
    tpu.vector_store %arg6[%c0_46, %c0_47], %36 {strides = array<i32>} : memref<8x5xf32, #tpu.memory_space<vmem>>, vector<8x5xf32>,
    return
  }
  func.func @transform_0(%arg0: i32) -> (i32, i32, i32) {
    %c0_i32 = arith.constant 0 : i32
    %c0_i32_0 = arith.constant 0 : i32
    %c0_i32_1 = arith.constant 0 : i32
    return %arg0, %c0_i32, %c0_i32_0 : i32, i32, i32
  }
  func.func @transform_1(%arg0: i32) -> (i32, i32) {
    %c0_i32 = arith.constant 0 : i32
    %c0_i32_0 = arith.constant 0 : i32
    %c0_i32_1 = arith.constant 0 : i32
    return %c0_i32, %c0_i32_0 : i32, i32
  }
  func.func @transform_2(%arg0: i32) -> (i32, i32) {
    %c0_i32 = arith.constant 0 : i32
    %c0_i32_0 = arith.constant 0 : i32
    %c0_i32_1 = arith.constant 0 : i32
    return %c0_i32, %c0_i32_0 : i32, i32
  }
  func.func @transform_3(%arg0: i32) -> (i32, i32) {
    %c0_i32 = arith.constant 0 : i32
    %c0_i32_0 = arith.constant 0 : i32
    %c0_i32_1 = arith.constant 0 : i32
    return %c0_i32, %c0_i32_0 : i32, i32
  }
  func.func @transform_4(%arg0: i32) -> (i32, i32) {
    %c0_i32 = arith.constant 0 : i32
    %c0_i32_0 = arith.constant 0 : i32
    %c0_i32_1 = arith.constant 0 : i32
    return %c0_i32, %c0_i32_0 : i32, i32
  }
  func.func @transform_5(%arg0: i32) -> (i32, i32) {
    %c0_i32 = arith.constant 0 : i32
    %c0_i32_0 = arith.constant 0 : i32
    return %arg0, %c0_i32 : i32, i32
  }
}

</mosaic_0001>

<llo_original>
// kernel: cnn2_forward.1
$region0: #{cnn2_forward.1}
  #allocation0 [shape = 'u32[]', space=smem, size = 0x4, offset = 0x4, fixed_abs, tag = 'smem constant byte address 0x4 - core index']
  #allocation1 [shape = 'u32[72,128]{1,0:T(1,128)}', space=vmem, size = 0x9000, scoped, tag = 'internal scratch']
  #allocation2 [shape = 'bf16[8,16,64]{2,1,0:T(8,128)(2,1)}', space=vmem, size = 0x8000, scoped, tag = 'scratch operand']
  %s0 = inlined_call_operand.vmem [shape: bf16[8,8,16], index: 0, kind: input, shape index: {}]
  %s1 = inlined_call_operand.vmem [shape: bf16[64,128], index: 1, kind: input, shape index: {}]
  %s2 = inlined_call_operand.vmem [shape: f32[16,128], index: 2, kind: input, shape index: {}]
  %s3 = inlined_call_operand.vmem [shape: bf16[128,5], index: 3, kind: input, shape index: {}]
  %s4 = inlined_call_operand.vmem [shape: f32[1,5], index: 4, kind: input, shape index: {}]
  %s5 = inlined_call_operand.vmem [shape: f32[8,5], index: 5, kind: output, shape index: {}]
  %s6 = sld [smem:[#allocation0]]
  $region30: #{cnn2_forward.1} parent=0
    _
  %s8 = ssub.s32 1, %s6
  %s9 = scalar_select 0, %s8, %s6
  // Predicated region
  $region2: #{cnn2_forward.1} parent=0 // pred_check
    _
  $region3: #{cnn2_forward.1} parent=0 // pred_check_branch
    %11 = sbr.rel (0) target = $region5
  $region4: #{cnn2_forward.1} parent=0 // pred_region
    _
  $region5: #{cnn2_forward.1} parent=0 // pred_fallthru
    _
  // Predicated region
  $region6: #{cnn2_forward.1} parent=0 // pred_check
    _
  $region7: #{cnn2_forward.1} parent=0 // pred_check_branch
    %13 = sbr.rel (0) target = $region9
  $region8: #{cnn2_forward.1} parent=0 // pred_region
    _
  $region9: #{cnn2_forward.1} parent=0 // pred_fallthru
    _
  // Predicated region
  $region10: #{cnn2_forward.1} parent=0 // pred_check
    _
  $region11: #{cnn2_forward.1} parent=0 // pred_check_branch
    %15 = sbr.rel (0) target = $region13
  $region12: #{cnn2_forward.1} parent=0 // pred_region
    _
  $region13: #{cnn2_forward.1} parent=0 // pred_fallthru
    _
  // Predicated region
  $region14: #{cnn2_forward.1} parent=0 // pred_check
    _
  $region15: #{cnn2_forward.1} parent=0 // pred_check_branch
    %17 = sbr.rel (0) target = $region17
  $region16: #{cnn2_forward.1} parent=0 // pred_region
    _
  $region17: #{cnn2_forward.1} parent=0 // pred_fallthru
    _
  // Predicated region
  $region18: #{cnn2_forward.1} parent=0 // pred_check
    _
  $region19: #{cnn2_forward.1} parent=0 // pred_check_branch
    %19 = sbr.rel (0) target = $region21
  $region20: #{cnn2_forward.1} parent=0 // pred_region
    _
  $region21: #{cnn2_forward.1} parent=0 // pred_fallthru
    _
  %v21 = vld [vmem:[%s0] sm:$0xf]
  %v22 = vld [vmem:[%s0 + $0x4] sm:$0xf]
  %v23 = vld [vmem:[%s0 + $0x8] sm:$0xf]
  %v24 = vld [vmem:[%s0 + $0xc] sm:$0xf]
  %v25 = vld [vmem:[%s0 + $0x10] sm:$0xf]
  %v26 = vld [vmem:[%s0 + $0x14] sm:$0xf]
  %v27 = vld [vmem:[%s0 + $0x18] sm:$0xf]
  %v28 = vld [vmem:[%s0 + $0x1c] sm:$0xf]
  %vm29 = vcmask 123904
  %vm30 = vsmask.f32 1280
  %vm31 = vmand %vm29, %vm30
  %v32 = vld [vmem:[#allocation2] sm:$0x3]
  %v33 = vsel %vm31, 0, %v32
  %34 = vst [vmem:[#allocation2] sm:$0x3] %v33
  %v35 = vld [vmem:[#allocation2 + $0x8] sm:$0x3]
  %v36 = vsel %vm31, 0, %v35
  %37 = vst [vmem:[#allocation2 + $0x8] sm:$0x3] %v36
  %v38 = vld [vmem:[#allocation2 + $0x10] sm:$0x3]
  %v39 = vsel %vm31, 0, %v38
  %40 = vst [vmem:[#allocation2 + $0x10] sm:$0x3] %v39
  %v41 = vld [vmem:[#allocation2 + $0x18] sm:$0x3]
  %v42 = vsel %vm31, 0, %v41
  %43 = vst [vmem:[#allocation2 + $0x18] sm:$0x3] %v42
  %v44 = vld [vmem:[#allocation2 + $0x20] sm:$0x3]
  %v45 = vsel %vm31, 0, %v44
  %46 = vst [vmem:[#allocation2 + $0x20] sm:$0x3] %v45
  %v47 = vld [vmem:[#allocation2 + $0x28] sm:$0x3]
  %v48 = vsel %vm31, 0, %v47
  %49 = vst [vmem:[#allocation2 + $0x28] sm:$0x3] %v48
  %v50 = vld [vmem:[#allocation2 + $0x30] sm:$0x3]
  %v51 = vsel %vm31, 0, %v50
  %52 = vst [vmem:[#allocation2 + $0x30] sm:$0x3] %v51
  %v53 = vld [vmem:[#allocation2 + $0x38] sm:$0x3]
  %v54 = vsel %vm31, 0, %v53
  %55 = vst [vmem:[#allocation2 + $0x38] sm:$0x3] %v54
  %vm56 = vcmask 125953
  %vm57 = vsmask.f32 7942
  %vm58 = vmand %vm56, %vm57
  %v59 = vld [vmem:[#allocation2 + $0x4] sm:$0xe]
  %v60 = vsel %vm58, 0, %v59
  %61 = vst [vmem:[#allocation2 + $0x4] sm:$0xe] %v60
  %v62 = vld [vmem:[#allocation2 + $0xc] sm:$0xe]
  %v63 = vsel %vm58, 0, %v62
  %64 = vst [vmem:[#allocation2 + $0xc] sm:$0xe] %v63
  %v65 = vld [vmem:[#allocation2 + $0x14] sm:$0xe]
  %v66 = vsel %vm58, 0, %v65
  %67 = vst [vmem:[#allocation2 + $0x14] sm:$0xe] %v66
  %v68 = vld [vmem:[#allocation2 + $0x1c] sm:$0xe]
  %v69 = vsel %vm58, 0, %v68
  %70 = vst [vmem:[#allocation2 + $0x1c] sm:$0xe] %v69
  %v71 = vld [vmem:[#allocation2 + $0x24] sm:$0xe]
  %v72 = vsel %vm58, 0, %v71
  %73 = vst [vmem:[#allocation2 + $0x24] sm:$0xe] %v72
  %v74 = vld [vmem:[#allocation2 + $0x2c] sm:$0xe]
  %v75 = vsel %vm58, 0, %v74
  %76 = vst [vmem:[#allocation2 + $0x2c] sm:$0xe] %v75
  %v77 = vld [vmem:[#allocation2 + $0x34] sm:$0xe]
  %v78 = vsel %vm58, 0, %v77
  %79 = vst [vmem:[#allocation2 + $0x34] sm:$0xe] %v78
  %v80 = vld [vmem:[#allocation2 + $0x3c] sm:$0xe]
  %v81 = vsel %vm58, 0, %v80
  %82 = vst [vmem:[#allocation2 + $0x3c] sm:$0xe] %v81
  %v84 = vshrl.u32 %v21, 16
  %v86 = vrot.slane %v84, 6
  %v87 = vshll.u32 %v21, 16
  %v89 = vrot.slane %v87, 7
  %v90 = vor.u32 %v86, %v89
  %v91 = vrot.slane %v90, 4
  %v93 = vshrl.u32 %v22, 16
  %v95 = vrot.slane %v93, 6
  %v96 = vshll.u32 %v22, 16
  %v98 = vrot.slane %v96, 7
  %v99 = vor.u32 %v95, %v98
  %v100 = vrot.slane %v99, 4
  %v102 = vshrl.u32 %v23, 16
  %v104 = vrot.slane %v102, 6
  %v105 = vshll.u32 %v23, 16
  %v107 = vrot.slane %v105, 7
  %v108 = vor.u32 %v104, %v107
  %v109 = vrot.slane %v108, 4
  %v111 = vshrl.u32 %v24, 16
  %v113 = vrot.slane %v111, 6
  %v114 = vshll.u32 %v24, 16
  %v116 = vrot.slane %v114, 7
  %v117 = vor.u32 %v113, %v116
  %v118 = vrot.slane %v117, 4
  %v120 = vshrl.u32 %v25, 16
  %v122 = vrot.slane %v120, 6
  %v123 = vshll.u32 %v25, 16
  %v125 = vrot.slane %v123, 7
  %v126 = vor.u32 %v122, %v125
  %v127 = vrot.slane %v126, 4
  %v129 = vshrl.u32 %v26, 16
  %v131 = vrot.slane %v129, 6
  %v132 = vshll.u32 %v26, 16
  %v134 = vrot.slane %v132, 7
  %v135 = vor.u32 %v131, %v134
  %v136 = vrot.slane %v135, 4
  %v138 = vshrl.u32 %v27, 16
  %v140 = vrot.slane %v138, 6
  %v141 = vshll.u32 %v27, 16
  %v143 = vrot.slane %v141, 7
  %v144 = vor.u32 %v140, %v143
  %v145 = vrot.slane %v144, 4
  %v147 = vshrl.u32 %v28, 16
  %v149 = vrot.slane %v147, 6
  %v150 = vshll.u32 %v28, 16
  %v152 = vrot.slane %v150, 7
  %v153 = vor.u32 %v149, %v152
  %v154 = vrot.slane %v153, 4
  %v171 = vld [vmem:[#allocation2] sm:$0xe]
  %v172 = vsel %vm58, %v90, %v171
  %173 = vst [vmem:[#allocation2] sm:$0xe] %v172
  %v174 = vld [vmem:[#allocation2 + $0x4] sm:$0x3]
  %v175 = vsel %vm31, %v91, %v174
  %176 = vst [vmem:[#allocation2 + $0x4] sm:$0x3] %v175
  %v177 = vld [vmem:[#allocation2 + $0x8] sm:$0xe]
  %v178 = vsel %vm58, %v99, %v177
  %179 = vst [vmem:[#allocation2 + $0x8] sm:$0xe] %v178
  %v180 = vld [vmem:[#allocation2 + $0xc] sm:$0x3]
  %v181 = vsel %vm31, %v100, %v180
  %182 = vst [vmem:[#allocation2 + $0xc] sm:$0x3] %v181
  %v183 = vld [vmem:[#allocation2 + $0x10] sm:$0xe]
  %v184 = vsel %vm58, %v108, %v183
  %185 = vst [vmem:[#allocation2 + $0x10] sm:$0xe] %v184
  %v186 = vld [vmem:[#allocation2 + $0x14] sm:$0x3]
  %v187 = vsel %vm31, %v109, %v186
  %188 = vst [vmem:[#allocation2 + $0x14] sm:$0x3] %v187
  %v189 = vld [vmem:[#allocation2 + $0x18] sm:$0xe]
  %v190 = vsel %vm58, %v117, %v189
  %191 = vst [vmem:[#allocation2 + $0x18] sm:$0xe] %v190
  %v192 = vld [vmem:[#allocation2 + $0x1c] sm:$0x3]
  %v193 = vsel %vm31, %v118, %v192
  %194 = vst [vmem:[#allocation2 + $0x1c] sm:$0x3] %v193
  %v195 = vld [vmem:[#allocation2 + $0x20] sm:$0xe]
  %v196 = vsel %vm58, %v126, %v195
  %197 = vst [vmem:[#allocation2 + $0x20] sm:$0xe] %v196
  %v198 = vld [vmem:[#allocation2 + $0x24] sm:$0x3]
  %v199 = vsel %vm31, %v127, %v198
  %200 = vst [vmem:[#allocation2 + $0x24] sm:$0x3] %v199
  %v201 = vld [vmem:[#allocation2 + $0x28] sm:$0xe]
  %v202 = vsel %vm58, %v135, %v201
  %203 = vst [vmem:[#allocation2 + $0x28] sm:$0xe] %v202
  %v204 = vld [vmem:[#allocation2 + $0x2c] sm:$0x3]
  %v205 = vsel %vm31, %v136, %v204
  %206 = vst [vmem:[#allocation2 + $0x2c] sm:$0x3] %v205
  %v207 = vld [vmem:[#allocation2 + $0x30] sm:$0xe]
  %v208 = vsel %vm58, %v144, %v207
  %209 = vst [vmem:[#allocation2 + $0x30] sm:$0xe] %v208
  %v210 = vld [vmem:[#allocation2 + $0x34] sm:$0x3]
  %v211 = vsel %vm31, %v145, %v210
  %212 = vst [vmem:[#allocation2 + $0x34] sm:$0x3] %v211
  %v213 = vld [vmem:[#allocation2 + $0x38] sm:$0xe]
  %v214 = vsel %vm58, %v153, %v213
  %215 = vst [vmem:[#allocation2 + $0x38] sm:$0xe] %v214
  %v216 = vld [vmem:[#allocation2 + $0x3c] sm:$0x3]
  %v217 = vsel %vm31, %v154, %v216
  %218 = vst [vmem:[#allocation2 + $0x3c] sm:$0x3] %v217
  %vm219 = vcmask 254080
  %220 = vst.msk [vmem:[#allocation2] sm:$0x1] %vm219, 0
  %221 = vst.msk [vmem:[#allocation2 + $0x8] sm:$0x1] %vm219, 0
  %222 = vst.msk [vmem:[#allocation2 + $0x10] sm:$0x1] %vm219, 0
  %223 = vst.msk [vmem:[#allocation2 + $0x18] sm:$0x1] %vm219, 0
  %224 = vst.msk [vmem:[#allocation2 + $0x20] sm:$0x1] %vm219, 0
  %225 = vst.msk [vmem:[#allocation2 + $0x28] sm:$0x1] %vm219, 0
  %226 = vst.msk [vmem:[#allocation2 + $0x30] sm:$0x1] %vm219, 0
  %227 = vst.msk [vmem:[#allocation2 + $0x38] sm:$0x1] %vm219, 0
  %vm228 = vcmask 257153
  %229 = vst.msk [vmem:[#allocation2 + $0x4] sm:$0xe] %vm228, 0
  %230 = vst.msk [vmem:[#allocation2 + $0xc] sm:$0xe] %vm228, 0
  %231 = vst.msk [vmem:[#allocation2 + $0x14] sm:$0xe] %vm228, 0
  %232 = vst.msk [vmem:[#allocation2 + $0x1c] sm:$0xe] %vm228, 0
  %233 = vst.msk [vmem:[#allocation2 + $0x24] sm:$0xe] %vm228, 0
  %234 = vst.msk [vmem:[#allocation2 + $0x2c] sm:$0xe] %vm228, 0
  %235 = vst.msk [vmem:[#allocation2 + $0x34] sm:$0xe] %vm228, 0
  %236 = vst.msk [vmem:[#allocation2 + $0x3c] sm:$0xe] %vm228, 0
  %v245 = vrot.slane %v21, 7
  %v246 = vrot.slane %v245, 4
  %v247 = vrot.slane %v22, 7
  %v248 = vrot.slane %v247, 4
  %v249 = vrot.slane %v23, 7
  %v250 = vrot.slane %v249, 4
  %v251 = vrot.slane %v24, 7
  %v252 = vrot.slane %v251, 4
  %v253 = vrot.slane %v25, 7
  %v254 = vrot.slane %v253, 4
  %v255 = vrot.slane %v26, 7
  %v256 = vrot.slane %v255, 4
  %v257 = vrot.slane %v27, 7
  %v258 = vrot.slane %v257, 4
  %v259 = vrot.slane %v28, 7
  %v260 = vrot.slane %v259, 4
  %261 = vrot.lane.b32.xlu0 %v245, 16
  %v262 = vpop.permute.xlu0 %261
  %263 = vrot.lane.b32.xlu0 %v246, 16
  %v264 = vpop.permute.xlu0 %263
  %265 = vrot.lane.b32.xlu0 %v247, 16
  %v266 = vpop.permute.xlu0 %265
  %267 = vrot.lane.b32.xlu0 %v248, 16
  %v268 = vpop.permute.xlu0 %267
  %269 = vrot.lane.b32.xlu0 %v249, 16
  %v270 = vpop.permute.xlu0 %269
  %271 = vrot.lane.b32.xlu0 %v250, 16
  %v272 = vpop.permute.xlu0 %271
  %273 = vrot.lane.b32.xlu0 %v251, 16
  %v274 = vpop.permute.xlu0 %273
  %275 = vrot.lane.b32.xlu0 %v252, 16
  %v276 = vpop.permute.xlu0 %275
  %277 = vrot.lane.b32.xlu0 %v253, 16
  %v278 = vpop.permute.xlu0 %277
  %279 = vrot.lane.b32.xlu0 %v254, 16
  %v280 = vpop.permute.xlu0 %279
  %281 = vrot.lane.b32.xlu0 %v255, 16
  %v282 = vpop.permute.xlu0 %281
  %283 = vrot.lane.b32.xlu0 %v256, 16
  %v284 = vpop.permute.xlu0 %283
  %285 = vrot.lane.b32.xlu0 %v257, 16
  %v286 = vpop.permute.xlu0 %285
  %287 = vrot.lane.b32.xlu0 %v258, 16
  %v288 = vpop.permute.xlu0 %287
  %289 = vrot.lane.b32.xlu0 %v259, 16
  %v290 = vpop.permute.xlu0 %289
  %291 = vrot.lane.b32.xlu0 %v260, 16
  %v292 = vpop.permute.xlu0 %291
  %309 = vst.msk [vmem:[#allocation2] sm:$0xe] %vm228, %v262
  %310 = vst.msk [vmem:[#allocation2 + $0x4] sm:$0x1] %vm219, %v264
  %311 = vst.msk [vmem:[#allocation2 + $0x8] sm:$0xe] %vm228, %v266
  %312 = vst.msk [vmem:[#allocation2 + $0xc] sm:$0x1] %vm219, %v268
  %313 = vst.msk [vmem:[#allocation2 + $0x10] sm:$0xe] %vm228, %v270
  %314 = vst.msk [vmem:[#allocation2 + $0x14] sm:$0x1] %vm219, %v272
  %315 = vst.msk [vmem:[#allocation2 + $0x18] sm:$0xe] %vm228, %v274
  %316 = vst.msk [vmem:[#allocation2 + $0x1c] sm:$0x1] %vm219, %v276
  %317 = vst.msk [vmem:[#allocation2 + $0x20] sm:$0xe] %vm228, %v278
  %318 = vst.msk [vmem:[#allocation2 + $0x24] sm:$0x1] %vm219, %v280
  %319 = vst.msk [vmem:[#allocation2 + $0x28] sm:$0xe] %vm228, %v282
  %320 = vst.msk [vmem:[#allocation2 + $0x2c] sm:$0x1] %vm219, %v284
  %321 = vst.msk [vmem:[#allocation2 + $0x30] sm:$0xe] %vm228, %v286
  %322 = vst.msk [vmem:[#allocation2 + $0x34] sm:$0x1] %vm219, %v288
  %323 = vst.msk [vmem:[#allocation2 + $0x38] sm:$0xe] %vm228, %v290
  %324 = vst.msk [vmem:[#allocation2 + $0x3c] sm:$0x1] %vm219, %v292
  %vm325 = vcmask 385280
  %vm326 = vsmask.f32 256
  %vm327 = vmand %vm325, %vm326
  %v328 = vld [vmem:[#allocation2] sm:$0x1]
  %v329 = vsel %vm327, 0, %v328
  %330 = vst [vmem:[#allocation2] sm:$0x1] %v329
  %v331 = vld [vmem:[#allocation2 + $0x8] sm:$0x1]
  %v332 = vsel %vm327, 0, %v331
  %333 = vst [vmem:[#allocation2 + $0x8] sm:$0x1] %v332
  %v334 = vld [vmem:[#allocation2 + $0x10] sm:$0x1]
  %v335 = vsel %vm327, 0, %v334
  %336 = vst [vmem:[#allocation2 + $0x10] sm:$0x1] %v335
  %v337 = vld [vmem:[#allocation2 + $0x18] sm:$0x1]
  %v338 = vsel %vm327, 0, %v337
  %339 = vst [vmem:[#allocation2 + $0x18] sm:$0x1] %v338
  %v340 = vld [vmem:[#allocation2 + $0x20] sm:$0x1]
  %v341 = vsel %vm327, 0, %v340
  %342 = vst [vmem:[#allocation2 + $0x20] sm:$0x1] %v341
  %v343 = vld [vmem:[#allocation2 + $0x28] sm:$0x1]
  %v344 = vsel %vm327, 0, %v343
  %345 = vst [vmem:[#allocation2 + $0x28] sm:$0x1] %v344
  %v346 = vld [vmem:[#allocation2 + $0x30] sm:$0x1]
  %v347 = vsel %vm327, 0, %v346
  %348 = vst [vmem:[#allocation2 + $0x30] sm:$0x1] %v347
  %v349 = vld [vmem:[#allocation2 + $0x38] sm:$0x1]
  %v350 = vsel %vm327, 0, %v349
  %351 = vst [vmem:[#allocation2 + $0x38] sm:$0x1] %v350
  %vm352 = vcmask 388352
  %vm353 = vsmask.f32 7938
  %vm354 = vmand %vm352, %vm353
  %v355 = vld [vmem:[#allocation2 + $0x4] sm:$0xf]
  %v356 = vsel %vm354, 0, %v355
  %357 = vst [vmem:[#allocation2 + $0x4] sm:$0xf] %v356
  %v358 = vld [vmem:[#allocation2 + $0xc] sm:$0xf]
  %v359 = vsel %vm354, 0, %v358
  %360 = vst [vmem:[#allocation2 + $0xc] sm:$0xf] %v359
  %v361 = vld [vmem:[#allocation2 + $0x14] sm:$0xf]
  %v362 = vsel %vm354, 0, %v361
  %363 = vst [vmem:[#allocation2 + $0x14] sm:$0xf] %v362
  %v364 = vld [vmem:[#allocation2 + $0x1c] sm:$0xf]
  %v365 = vsel %vm354, 0, %v364
  %366 = vst [vmem:[#allocation2 + $0x1c] sm:$0xf] %v365
  %v367 = vld [vmem:[#allocation2 + $0x24] sm:$0xf]
  %v368 = vsel %vm354, 0, %v367
  %369 = vst [vmem:[#allocation2 + $0x24] sm:$0xf] %v368
  %v370 = vld [vmem:[#allocation2 + $0x2c] sm:$0xf]
  %v371 = vsel %vm354, 0, %v370
  %372 = vst [vmem:[#allocation2 + $0x2c] sm:$0xf] %v371
  %v373 = vld [vmem:[#allocation2 + $0x34] sm:$0xf]
  %v374 = vsel %vm354, 0, %v373
  %375 = vst [vmem:[#allocation2 + $0x34] sm:$0xf] %v374
  %v376 = vld [vmem:[#allocation2 + $0x3c] sm:$0xf]
  %v377 = vsel %vm354, 0, %v376
  %378 = vst [vmem:[#allocation2 + $0x3c] sm:$0xf] %v377
  %v379 = vrot.slane %v84, 7
  %v380 = vor.u32 %v379, %v87
  %v381 = vrot.slane %v379, 4
  %v382 = vrot.slane %v93, 7
  %v383 = vor.u32 %v382, %v96
  %v384 = vrot.slane %v382, 4
  %v385 = vrot.slane %v102, 7
  %v386 = vor.u32 %v385, %v105
  %v387 = vrot.slane %v385, 4
  %v388 = vrot.slane %v111, 7
  %v389 = vor.u32 %v388, %v114
  %v390 = vrot.slane %v388, 4
  %v391 = vrot.slane %v120, 7
  %v392 = vor.u32 %v391, %v123
  %v393 = vrot.slane %v391, 4
  %v394 = vrot.slane %v129, 7
  %v395 = vor.u32 %v394, %v132
  %v396 = vrot.slane %v394, 4
  %v397 = vrot.slane %v138, 7
  %v398 = vor.u32 %v397, %v141
  %v399 = vrot.slane %v397, 4
  %v400 = vrot.slane %v147, 7
  %v401 = vor.u32 %v400, %v150
  %v402 = vrot.slane %v400, 4
  %403 = vrot.lane.b32.xlu0 %v380, 32
  %v404 = vpop.permute.xlu0 %403
  %405 = vrot.lane.b32.xlu0 %v381, 32
  %v406 = vpop.permute.xlu0 %405
  %407 = vrot.lane.b32.xlu0 %v383, 32
  %v408 = vpop.permute.xlu0 %407
  %409 = vrot.lane.b32.xlu0 %v384, 32
  %v410 = vpop.permute.xlu0 %409
  %411 = vrot.lane.b32.xlu0 %v386, 32
  %v412 = vpop.permute.xlu0 %411
  %413 = vrot.lane.b32.xlu0 %v387, 32
  %v414 = vpop.permute.xlu0 %413
  %415 = vrot.lane.b32.xlu0 %v389, 32
  %v416 = vpop.permute.xlu0 %415
  %417 = vrot.lane.b32.xlu0 %v390, 32
  %v418 = vpop.permute.xlu0 %417
  %419 = vrot.lane.b32.xlu0 %v392, 32
  %v420 = vpop.permute.xlu0 %419
  %421 = vrot.lane.b32.xlu0 %v393, 32
  %v422 = vpop.permute.xlu0 %421
  %423 = vrot.lane.b32.xlu0 %v395, 32
  %v424 = vpop.permute.xlu0 %423
  %425 = vrot.lane.b32.xlu0 %v396, 32
  %v426 = vpop.permute.xlu0 %425
  %427 = vrot.lane.b32.xlu0 %v398, 32
  %v428 = vpop.permute.xlu0 %427
  %429 = vrot.lane.b32.xlu0 %v399, 32
  %v430 = vpop.permute.xlu0 %429
  %431 = vrot.lane.b32.xlu0 %v401, 32
  %v432 = vpop.permute.xlu0 %431
  %433 = vrot.lane.b32.xlu0 %v402, 32
  %v434 = vpop.permute.xlu0 %433
  %v451 = vld [vmem:[#allocation2] sm:$0xf]
  %v452 = vsel %vm354, %v404, %v451
  %453 = vst [vmem:[#allocation2] sm:$0xf] %v452
  %v454 = vld [vmem:[#allocation2 + $0x4] sm:$0x1]
  %v455 = vsel %vm327, %v406, %v454
  %456 = vst [vmem:[#allocation2 + $0x4] sm:$0x1] %v455
  %v457 = vld [vmem:[#allocation2 + $0x8] sm:$0xf]
  %v458 = vsel %vm354, %v408, %v457
  %459 = vst [vmem:[#allocation2 + $0x8] sm:$0xf] %v458
  %v460 = vld [vmem:[#allocation2 + $0xc] sm:$0x1]
  %v461 = vsel %vm327, %v410, %v460
  %462 = vst [vmem:[#allocation2 + $0xc] sm:$0x1] %v461
  %v463 = vld [vmem:[#allocation2 + $0x10] sm:$0xf]
  %v464 = vsel %vm354, %v412, %v463
  %465 = vst [vmem:[#allocation2 + $0x10] sm:$0xf] %v464
  %v466 = vld [vmem:[#allocation2 + $0x14] sm:$0x1]
  %v467 = vsel %vm327, %v414, %v466
  %468 = vst [vmem:[#allocation2 + $0x14] sm:$0x1] %v467
  %v469 = vld [vmem:[#allocation2 + $0x18] sm:$0xf]
  %v470 = vsel %vm354, %v416, %v469
  %471 = vst [vmem:[#allocation2 + $0x18] sm:$0xf] %v470
  %v472 = vld [vmem:[#allocation2 + $0x1c] sm:$0x1]
  %v473 = vsel %vm327, %v418, %v472
  %474 = vst [vmem:[#allocation2 + $0x1c] sm:$0x1] %v473
  %v475 = vld [vmem:[#allocation2 + $0x20] sm:$0xf]
  %v476 = vsel %vm354, %v420, %v475
  %477 = vst [vmem:[#allocation2 + $0x20] sm:$0xf] %v476
  %v478 = vld [vmem:[#allocation2 + $0x24] sm:$0x1]
  %v479 = vsel %vm327, %v422, %v478
  %480 = vst [vmem:[#allocation2 + $0x24] sm:$0x1] %v479
  %v481 = vld [vmem:[#allocation2 + $0x28] sm:$0xf]
  %v482 = vsel %vm354, %v424, %v481
  %483 = vst [vmem:[#allocation2 + $0x28] sm:$0xf] %v482
  %v484 = vld [vmem:[#allocation2 + $0x2c] sm:$0x1]
  %v485 = vsel %vm327, %v426, %v484
  %486 = vst [vmem:[#allocation2 + $0x2c] sm:$0x1] %v485
  %v487 = vld [vmem:[#allocation2 + $0x30] sm:$0xf]
  %v488 = vsel %vm354, %v428, %v487
  %489 = vst [vmem:[#allocation2 + $0x30] sm:$0xf] %v488
  %v490 = vld [vmem:[#allocation2 + $0x34] sm:$0x1]
  %v491 = vsel %vm327, %v430, %v490
  %492 = vst [vmem:[#allocation2 + $0x34] sm:$0x1] %v491
  %v493 = vld [vmem:[#allocation2 + $0x38] sm:$0xf]
  %v494 = vsel %vm354, %v432, %v493
  %495 = vst [vmem:[#allocation2 + $0x38] sm:$0xf] %v494
  %v496 = vld [vmem:[#allocation2 + $0x3c] sm:$0x1]
  %v497 = vsel %vm327, %v434, %v496
  %498 = vst [vmem:[#allocation2 + $0x3c] sm:$0x1] %v497
  %vm499 = vcmask 519552
  %500 = vst.msk [vmem:[#allocation2 + $0x4] sm:$0xf] %vm499, 0
  %501 = vst.msk [vmem:[#allocation2 + $0xc] sm:$0xf] %vm499, 0
  %502 = vst.msk [vmem:[#allocation2 + $0x14] sm:$0xf] %vm499, 0
  %503 = vst.msk [vmem:[#allocation2 + $0x1c] sm:$0xf] %vm499, 0
  %504 = vst.msk [vmem:[#allocation2 + $0x24] sm:$0xf] %vm499, 0
  %505 = vst.msk [vmem:[#allocation2 + $0x2c] sm:$0xf] %vm499, 0
  %506 = vst.msk [vmem:[#allocation2 + $0x34] sm:$0xf] %vm499, 0
  %507 = vst.msk [vmem:[#allocation2 + $0x3c] sm:$0xf] %vm499, 0
  %508 = vrot.lane.b32.xlu0 %v21, 48
  %v509 = vpop.permute.xlu0 %508
  %510 = vrot.lane.b32.xlu0 %v22, 48
  %v511 = vpop.permute.xlu0 %510
  %512 = vrot.lane.b32.xlu0 %v23, 48
  %v513 = vpop.permute.xlu0 %512
  %514 = vrot.lane.b32.xlu0 %v24, 48
  %v515 = vpop.permute.xlu0 %514
  %516 = vrot.lane.b32.xlu0 %v25, 48
  %v517 = vpop.permute.xlu0 %516
  %518 = vrot.lane.b32.xlu0 %v26, 48
  %v519 = vpop.permute.xlu0 %518
  %520 = vrot.lane.b32.xlu0 %v27, 48
  %v521 = vpop.permute.xlu0 %520
  %522 = vrot.lane.b32.xlu0 %v28, 48
  %v523 = vpop.permute.xlu0 %522
  %532 = vst.msk [vmem:[#allocation2] sm:$0xf] %vm499, %v509
  %533 = vst.msk [vmem:[#allocation2 + $0x8] sm:$0xf] %vm499, %v511
  %534 = vst.msk [vmem:[#allocation2 + $0x10] sm:$0xf] %vm499, %v513
  %535 = vst.msk [vmem:[#allocation2 + $0x18] sm:$0xf] %vm499, %v515
  %536 = vst.msk [vmem:[#allocation2 + $0x20] sm:$0xf] %vm499, %v517
  %537 = vst.msk [vmem:[#allocation2 + $0x28] sm:$0xf] %vm499, %v519
  %538 = vst.msk [vmem:[#allocation2 + $0x30] sm:$0xf] %vm499, %v521
  %539 = vst.msk [vmem:[#allocation2 + $0x38] sm:$0xf] %vm499, %v523
  %v540 = vld [vmem:[#allocation2] sm:$0xf]
  %v541 = vld [vmem:[#allocation2 + $0x4] sm:$0xf]
  %v542 = vld [vmem:[#allocation2 + $0x8] sm:$0xf]
  %v543 = vld [vmem:[#allocation2 + $0xc] sm:$0xf]
  %v544 = vld [vmem:[#allocation2 + $0x10] sm:$0xf]
  %v545 = vld [vmem:[#allocation2 + $0x14] sm:$0xf]
  %v546 = vld [vmem:[#allocation2 + $0x18] sm:$0xf]
  %v547 = vld [vmem:[#allocation2 + $0x1c] sm:$0xf]
  %v548 = vld [vmem:[#allocation2 + $0x20] sm:$0xf]
  %v549 = vld [vmem:[#allocation2 + $0x24] sm:$0xf]
  %v550 = vld [vmem:[#allocation2 + $0x28] sm:$0xf]
  %v551 = vld [vmem:[#allocation2 + $0x2c] sm:$0xf]
  %v552 = vld [vmem:[#allocation2 + $0x30] sm:$0xf]
  %v553 = vld [vmem:[#allocation2 + $0x34] sm:$0xf]
  %v554 = vld [vmem:[#allocation2 + $0x38] sm:$0xf]
  %v555 = vld [vmem:[#allocation2 + $0x3c] sm:$0xf]
  %v556 = vld [vmem:[%s1] sm:$0xf]
  %v557 = vld [vmem:[%s1 + $0x4] sm:$0xf]
  %v558 = vld [vmem:[%s1 + $0x8] sm:$0xf]
  %v559 = vld [vmem:[%s1 + $0xc] sm:$0xf]
  %v560 = vld [vmem:[%s1 + $0x10] sm:$0xf]
  %v561 = vld [vmem:[%s1 + $0x14] sm:$0xf]
  %v562 = vld [vmem:[%s1 + $0x18] sm:$0xf]
  %v563 = vld [vmem:[%s1 + $0x1c] sm:$0xf]
  %v580 = vunpack.c.l.b16 %v540
  %v581 = vunpack.c.l.b16 %v541
  %v582 = vunpack.c.l.b16 %v542
  %v583 = vunpack.c.l.b16 %v543
  %v584 = vunpack.c.l.b16 %v544
  %v585 = vunpack.c.l.b16 %v545
  %v586 = vunpack.c.l.b16 %v546
  %v587 = vunpack.c.l.b16 %v547
  %v588 = vunpack.c.l.b16 %v548
  %v589 = vunpack.c.l.b16 %v549
  %v590 = vunpack.c.l.b16 %v550
  %v591 = vunpack.c.l.b16 %v551
  %v592 = vunpack.c.l.b16 %v552
  %v593 = vunpack.c.l.b16 %v553
  %v594 = vunpack.c.l.b16 %v554
  %v595 = vunpack.c.l.b16 %v555
  %v596 = vpack.c.b16 %v581, %v580
  %v597 = vpack.c.b16 %v583, %v582
  %v598 = vpack.c.b16 %v585, %v584
  %v599 = vpack.c.b16 %v587, %v586
  %v600 = vpack.c.b16 %v589, %v588
  %v601 = vpack.c.b16 %v591, %v590
  %v602 = vpack.c.b16 %v593, %v592
  %v603 = vpack.c.b16 %v595, %v594
  %v612 = vunpack.c.l.b16 %v556
  %v613 = vunpack.c.l.b16 %v557
  %v614 = vunpack.c.l.b16 %v558
  %v615 = vunpack.c.l.b16 %v559
  %v616 = vunpack.c.l.b16 %v560
  %v617 = vunpack.c.l.b16 %v561
  %v618 = vunpack.c.l.b16 %v562
  %v619 = vunpack.c.l.b16 %v563
  %v620 = vpack.c.b16 %v613, %v612
  %v621 = vpack.c.b16 %v615, %v614
  %v622 = vpack.c.b16 %v617, %v616
  %v623 = vpack.c.b16 %v619, %v618
  %vm628 = vcmask 523264
  %v630 = vsel %vm628, %v596, 0
  %v633 = vsel %vm628, %v597, 0
  %v636 = vsel %vm628, %v598, 0
  %v639 = vsel %vm628, %v599, 0
  %v642 = vsel %vm628, %v600, 0
  %v645 = vsel %vm628, %v601, 0
  %v648 = vsel %vm628, %v602, 0
  %v651 = vsel %vm628, %v603, 0
  %653 = vmatpush.bf16.msra.mxu0 0
  %654 = vmatpush.bf16.msra.mxu0 0
  %655 = vmatpush.bf16.msra.mxu0 0
  %656 = vmatpush.bf16.msra.mxu0 0
  %657 = vmatpush.bf16.msra.mxu0 %v623
  %658 = vmatpush.bf16.msra.mxu0 %v622
  %659 = vmatpush.bf16.msra.mxu0 %v621
  %660 = vmatpush.bf16.msra.mxu0 %v620
  %661 = vmatmul.bf16.gmra.mxu0 %v630
  %v662 = vpop.f32.mrf.mxu0
  %v663 = vadd.f32 0.0, %v662
  %v664 = vpop.f32.mrf.mxu0
  %v665 = vadd.f32 0.0, %v664
  %666 = vmatmul.bf16.gmra.mxu0 %v633
  %v667 = vpop.f32.mrf.mxu0
  %v668 = vadd.f32 0.0, %v667
  %v669 = vpop.f32.mrf.mxu0
  %v670 = vadd.f32 0.0, %v669
  %671 = vmatmul.bf16.gmra.mxu0 %v636
  %v672 = vpop.f32.mrf.mxu0
  %v673 = vadd.f32 0.0, %v672
  %v674 = vpop.f32.mrf.mxu0
  %v675 = vadd.f32 0.0, %v674
  %676 = vmatmul.bf16.gmra.mxu0 %v639
  %v677 = vpop.f32.mrf.mxu0
  %v678 = vadd.f32 0.0, %v677
  %v679 = vpop.f32.mrf.mxu0
  %v680 = vadd.f32 0.0, %v679
  %681 = vmatmul.bf16.gmra.mxu0 %v642
  %v682 = vpop.f32.mrf.mxu0
  %v683 = vadd.f32 0.0, %v682
  %v684 = vpop.f32.mrf.mxu0
  %v685 = vadd.f32 0.0, %v684
  %686 = vmatmul.bf16.gmra.mxu0 %v645
  %v687 = vpop.f32.mrf.mxu0
  %v688 = vadd.f32 0.0, %v687
  %v689 = vpop.f32.mrf.mxu0
  %v690 = vadd.f32 0.0, %v689
  %691 = vmatmul.bf16.gmra.mxu0 %v648
  %v692 = vpop.f32.mrf.mxu0
  %v693 = vadd.f32 0.0, %v692
  %v694 = vpop.f32.mrf.mxu0
  %v695 = vadd.f32 0.0, %v694
  %696 = vmatmul.bf16.gmra.mxu0 %v651
  %v697 = vpop.f32.mrf.mxu0
  %v698 = vadd.f32 0.0, %v697
  %v699 = vpop.f32.mrf.mxu0
  %v700 = vadd.f32 0.0, %v699
  %701 = vdwg.mxu0
  %v702 = vld [vmem:[%s2] sm:$0xff]
  %v703 = vld [vmem:[%s2 + $0x8] sm:$0xff]
  %v704 = vadd.f32 %v663, %v702
  %v705 = vadd.f32 %v665, %v703
  %v706 = vadd.f32 %v668, %v702
  %v707 = vadd.f32 %v670, %v703
  %v708 = vadd.f32 %v673, %v702
  %v709 = vadd.f32 %v675, %v703
  %v710 = vadd.f32 %v678, %v702
  %v711 = vadd.f32 %v680, %v703
  %v712 = vadd.f32 %v683, %v702
  %v713 = vadd.f32 %v685, %v703
  %v714 = vadd.f32 %v688, %v702
  %v715 = vadd.f32 %v690, %v703
  %v716 = vadd.f32 %v693, %v702
  %v717 = vadd.f32 %v695, %v703
  %v718 = vadd.f32 %v698, %v702
  %v719 = vadd.f32 %v700, %v703
  %v720 = vmax.f32 %v704, 0.0
  %v721 = vmax.f32 %v705, 0.0
  %v722 = vmax.f32 %v706, 0.0
  %v723 = vmax.f32 %v707, 0.0
  %v724 = vmax.f32 %v708, 0.0
  %v725 = vmax.f32 %v709, 0.0
  %v726 = vmax.f32 %v710, 0.0
  %v727 = vmax.f32 %v711, 0.0
  %v728 = vmax.f32 %v712, 0.0
  %v729 = vmax.f32 %v713, 0.0
  %v730 = vmax.f32 %v714, 0.0
  %v731 = vmax.f32 %v715, 0.0
  %v732 = vmax.f32 %v716, 0.0
  %v733 = vmax.f32 %v717, 0.0
  %v734 = vmax.f32 %v718, 0.0
  %v735 = vmax.f32 %v719, 0.0
  %v736 = vmax.f32 %v720, %v721
  %v737 = vrot.slane %v736, 4
  %v738 = vmax.f32 %v736, %v737
  %v739 = vrot.slane %v738, 2
  %v740 = vmax.f32 %v738, %v739
  %v741 = vrot.slane %v740, 1
  %v742 = vmax.f32 %v740, %v741
  %v743 = vmax.f32 %v722, %v723
  %v744 = vrot.slane %v743, 4
  %v745 = vmax.f32 %v743, %v744
  %v746 = vrot.slane %v745, 2
  %v747 = vmax.f32 %v745, %v746
  %v748 = vrot.slane %v747, 1
  %v749 = vmax.f32 %v747, %v748
  %v750 = vmax.f32 %v724, %v725
  %v751 = vrot.slane %v750, 4
  %v752 = vmax.f32 %v750, %v751
  %v753 = vrot.slane %v752, 2
  %v754 = vmax.f32 %v752, %v753
  %v755 = vrot.slane %v754, 1
  %v756 = vmax.f32 %v754, %v755
  %v757 = vmax.f32 %v726, %v727
  %v758 = vrot.slane %v757, 4
  %v759 = vmax.f32 %v757, %v758
  %v760 = vrot.slane %v759, 2
  %v761 = vmax.f32 %v759, %v760
  %v762 = vrot.slane %v761, 1
  %v763 = vmax.f32 %v761, %v762
  %v764 = vmax.f32 %v728, %v729
  %v765 = vrot.slane %v764, 4
  %v766 = vmax.f32 %v764, %v765
  %v767 = vrot.slane %v766, 2
  %v768 = vmax.f32 %v766, %v767
  %v769 = vrot.slane %v768, 1
  %v770 = vmax.f32 %v768, %v769
  %v771 = vmax.f32 %v730, %v731
  %v772 = vrot.slane %v771, 4
  %v773 = vmax.f32 %v771, %v772
  %v774 = vrot.slane %v773, 2
  %v775 = vmax.f32 %v773, %v774
  %v776 = vrot.slane %v775, 1
  %v777 = vmax.f32 %v775, %v776
  %v778 = vmax.f32 %v732, %v733
  %v779 = vrot.slane %v778, 4
  %v780 = vmax.f32 %v778, %v779
  %v781 = vrot.slane %v780, 2
  %v782 = vmax.f32 %v780, %v781
  %v783 = vrot.slane %v782, 1
  %v784 = vmax.f32 %v782, %v783
  %v785 = vmax.f32 %v734, %v735
  %v786 = vrot.slane %v785, 4
  %v787 = vmax.f32 %v785, %v786
  %v788 = vrot.slane %v787, 2
  %v789 = vmax.f32 %v787, %v788
  %v790 = vrot.slane %v789, 1
  %v791 = vmax.f32 %v789, %v790
  %v792 = vpack.c.bf16 %v742, %v742
  %v793 = vpack.c.bf16 %v749, %v749
  %v794 = vpack.c.bf16 %v756, %v756
  %v795 = vpack.c.bf16 %v763, %v763
  %v796 = vpack.c.bf16 %v770, %v770
  %v797 = vpack.c.bf16 %v777, %v777
  %v798 = vpack.c.bf16 %v784, %v784
  %v799 = vpack.c.bf16 %v791, %v791
  %v800 = vld [vmem:[%s3] sm:$0xf]
  %v801 = vld [vmem:[%s3 + $0x4] sm:$0xf]
  %v802 = vld [vmem:[%s3 + $0x8] sm:$0xf]
  %v803 = vld [vmem:[%s3 + $0xc] sm:$0xf]
  %v804 = vld [vmem:[%s3 + $0x10] sm:$0xf]
  %v805 = vld [vmem:[%s3 + $0x14] sm:$0xf]
  %v806 = vld [vmem:[%s3 + $0x18] sm:$0xf]
  %v807 = vld [vmem:[%s3 + $0x1c] sm:$0xf]
  %v808 = vld [vmem:[%s3 + $0x20] sm:$0xf]
  %v809 = vld [vmem:[%s3 + $0x24] sm:$0xf]
  %v810 = vld [vmem:[%s3 + $0x28] sm:$0xf]
  %v811 = vld [vmem:[%s3 + $0x2c] sm:$0xf]
  %v812 = vld [vmem:[%s3 + $0x30] sm:$0xf]
  %v813 = vld [vmem:[%s3 + $0x34] sm:$0xf]
  %v814 = vld [vmem:[%s3 + $0x38] sm:$0xf]
  %v815 = vld [vmem:[%s3 + $0x3c] sm:$0xf]
  %v816 = vld [vmem:[%s4] sm:$0x1]
  %v818 = vperm.slane %v816, 0
  %v828 = vunpack.c.l.b16 %v792
  %v829 = vunpack.c.l.b16 %v793
  %v830 = vunpack.c.l.b16 %v794
  %v831 = vunpack.c.l.b16 %v795
  %v832 = vunpack.c.l.b16 %v796
  %v833 = vunpack.c.l.b16 %v797
  %v834 = vunpack.c.l.b16 %v798
  %v835 = vunpack.c.l.b16 %v799
  %vm836 = vcmask 1041409
  %v837 = vsel %vm836, %v829, %v828
  %vm838 = vcmask 1042434
  %v839 = vsel %vm838, %v830, %v837
  %vm840 = vcmask 1043459
  %v841 = vsel %vm840, %v831, %v839
  %vm842 = vcmask 1044484
  %v843 = vsel %vm842, %v832, %v841
  %vm844 = vcmask 1045509
  %v845 = vsel %vm844, %v833, %v843
  %vm846 = vcmask 1046534
  %v847 = vsel %vm846, %v834, %v845
  %vm848 = vcmask 1047559
  %v849 = vsel %vm848, %v835, %v847
  %v850 = vpack.c.b16 %v849, %v849
  %v868 = vunpack.c.l.b16 %v800
  %v869 = vunpack.c.l.b16 %v801
  %v870 = vunpack.c.l.b16 %v802
  %v871 = vunpack.c.l.b16 %v803
  %v872 = vunpack.c.l.b16 %v804
  %v873 = vunpack.c.l.b16 %v805
  %v874 = vunpack.c.l.b16 %v806
  %v875 = vunpack.c.l.b16 %v807
  %v876 = vunpack.c.l.b16 %v808
  %v877 = vunpack.c.l.b16 %v809
  %v878 = vunpack.c.l.b16 %v810
  %v879 = vunpack.c.l.b16 %v811
  %v880 = vunpack.c.l.b16 %v812
  %v881 = vunpack.c.l.b16 %v813
  %v882 = vunpack.c.l.b16 %v814
  %v883 = vunpack.c.l.b16 %v815
  %v884 = vpack.c.b16 %v869, %v868
  %v885 = vpack.c.b16 %v871, %v870
  %v886 = vpack.c.b16 %v873, %v872
  %v887 = vpack.c.b16 %v875, %v874
  %v888 = vpack.c.b16 %v877, %v876
  %v889 = vpack.c.b16 %v879, %v878
  %v890 = vpack.c.b16 %v881, %v880
  %v891 = vpack.c.b16 %v883, %v882
  %900 = vmatpush.bf16.msra.mxu0 %v891
  %901 = vmatpush.bf16.msra.mxu0 %v890
  %902 = vmatpush.bf16.msra.mxu0 %v889
  %903 = vmatpush.bf16.msra.mxu0 %v888
  %904 = vmatpush.bf16.msra.mxu0 %v887
  %905 = vmatpush.bf16.msra.mxu0 %v886
  %906 = vmatpush.bf16.msra.mxu0 %v885
  %907 = vmatpush.bf16.msra.mxu0 %v884
  %908 = vmatmul.bf16.gmra.mxu0 %v850
  %v909 = vpop.f32.mrf.mxu0
  %v910 = vadd.f32 %v818, %v909
  %v911 = vpop.f32.mrf.mxu0
  %912 = vdwg.mxu0
  %vm913 = vcmask 39936
  %914 = vst.msk [vmem:[%s5] sm:$0xff] %vm913, %v910
  // Predicated region
  $region22: #{cnn2_forward.1} parent=0 // pred_check
    _
  $region23: #{cnn2_forward.1} parent=0 // pred_check_branch
    %916 = sbr.rel (0) target = $region25
  $region24: #{cnn2_forward.1} parent=0 // pred_region
    _
  $region25: #{cnn2_forward.1} parent=0 // pred_fallthru
    _
  // Predicated region
  $region26: #{cnn2_forward.1} parent=0 // pred_check
    _
  $region27: #{cnn2_forward.1} parent=0 // pred_check_branch
    %918 = sbr.rel (0) target = $region29
  $region28: #{cnn2_forward.1} parent=0 // pred_region
    _
  $region29: #{cnn2_forward.1} parent=0 // pred_fallthru
    _

</llo_original>
